<compile_context>
chip_gen: v7x
topology: tpu7x:2x2x1
jax: 0.10.0
libtpu: 0.0.40
codegen_flags: <defaults>
</compile_context>

<pallas_src>
import functools

import jax
import jax.numpy as jnp
from jax import lax
from jax.experimental import pallas as pl
from jax.experimental.pallas import tpu as pltpu


def _inverted_residual_kernel(*refs, W, L, use_res, has_expand, compute_dtype):
    """One grid step = one (C, L) slab, L = batch_block * H * W (lane axis)."""
    if has_expand:
        (x_ref, w1_ref, b1_ref, wdw_ref, b2_ref, w3_ref, b3_ref,
         m9_ref, o_ref) = refs
    else:
        (x_ref, wdw_ref, b2_ref, w3_ref, b3_ref, m9_ref, o_ref) = refs

    x = x_ref[...]                              # (Cin_p, L) lane-dense slab
    wdw = wdw_ref[...]                          # (Cexp_p, 9), BN scale folded in
    b2 = b2_ref[...]                            # (Cexp_p, 1)
    w3 = w3_ref[...].astype(compute_dtype)      # (Cout_p, Cexp_p)
    b3 = b3_ref[...]                            # (Cout_p, 1)
    m9 = m9_ref[...]                            # (9, L) zero-pad validity masks

    # ---- 1x1 expand (MXU) + BN shift + ReLU6 (absent when t == 1) ----
    if has_expand:
        w1 = w1_ref[...].astype(compute_dtype)  # (Cexp_p, Cin_p)
        b1 = b1_ref[...]
        y = jnp.dot(w1, x.astype(compute_dtype),
                    preferred_element_type=jnp.float32)          # (Cexp_p, L)
        y = jnp.clip(y + b1, 0.0, 6.0)
    else:
        y = x.astype(jnp.float32)

    # ---- 3x3 depthwise, pad=1 (stride handled in wrapper): 9 rolls + folded taps ----
    acc = y * wdw[:, 4:5]                       # center tap (mask is all-ones)
    for k in range(9):
        if k == 4:
            continue
        dy, dx = k // 3 - 1, k % 3 - 1
        off = dy * W + dx                       # flat lane offset of this tap
        wk = wdw[:, k:k + 1] * m9[k:k + 1]      # pre-folded mask*weight, (Cexp_p, L)
        shifted = pltpu.roll(y, (-off) % L, axis=1)
        acc = acc + shifted * wk
    y2 = jnp.clip(acc + b2, 0.0, 6.0)

    # ---- 1x1 project (MXU) + BN shift (no activation), optional residual ----
    out = jnp.dot(w3, y2.astype(compute_dtype),
                  preferred_element_type=jnp.float32) + b3       # (Cout_p, L)
    if use_res:
        out = out + x.astype(jnp.float32)
    o_ref[...] = out.astype(o_ref.dtype)


def _fold_bn(w, bn, eps=1e-5):
    """Fold eval-mode BatchNorm into the preceding conv weight -> (w*scale, shift)."""
    gamma, beta, mean, var = bn
    scale = gamma / jnp.sqrt(var + eps)
    return w * scale[:, None], (beta - mean * scale)[:, None]


def _pad8(c):
    return -(-c // 8) * 8


def _tensorcores_per_chip():
    try:
        d = jax.devices()[0]
        n = getattr(d, "num_cores", None)
        if n:
            return int(n)
        if "v7" in str(getattr(d, "device_kind", "")).lower():
            return 2
    except Exception:
        pass
    return 1


def inverted_residual(x, params, *, stride, use_res, has_expand,
                      batch_block=None, compute_dtype=jnp.float32, eps=1e-5):
    """x: (N, Cin, H, W) float32, NCHW (PyTorch layout)."""
    N, Cin, H, W = x.shape
    Cexp = params["wdw"].shape[0]
    Cout = params["w3"].shape[0]
    HW = H * W
    f32 = jnp.float32

    Cin_p, Cexp_p, Cout_p = _pad8(Cin), _pad8(Cexp), _pad8(Cout)

    # ---- fold BN scales into conv weights; zero-pad channels to sublane multiples ----
    wdwf, b2 = _fold_bn(params["wdw"].reshape(Cexp, 9), params["bn2"], eps)
    w3f, b3 = _fold_bn(params["w3"], params["bn3"], eps)
    wdw_p = jnp.zeros((Cexp_p, 9), f32).at[:Cexp].set(wdwf)
    b2_p = jnp.zeros((Cexp_p, 1), f32).at[:Cexp].set(b2)
    w3_p = jnp.zeros((Cout_p, Cexp_p), f32).at[:Cout, :Cexp].set(w3f)
    b3_p = jnp.zeros((Cout_p, 1), f32).at[:Cout].set(b3)
    if has_expand:
        w1f, b1 = _fold_bn(params["w1"], params["bn1"], eps)
        w1_p = jnp.zeros((Cexp_p, Cin_p), f32).at[:Cexp, :Cin].set(w1f)
        b1_p = jnp.zeros((Cexp_p, 1), f32).at[:Cexp].set(b1)

    # ---- batch blocking: full batch on single-TC chips, half per core on v7x ----
    if batch_block is None:
        cores = _tensorcores_per_chip()
        if cores >= 2 and N % 2 == 0 and ((N // 2) * HW) % 128 == 0:
            batch_block = N // 2            # 2-step "parallel" grid, one slab per TC
        else:
            batch_block = N                 # grid=(1,): biggest block, no step churn
    assert N % batch_block == 0, "batch_block must divide N"
    assert batch_block == N or (batch_block * HW) % 128 == 0, \
        "per-step lane extent must be a multiple of 128 (or cover the full batch)"
    grid = (N // batch_block,)
    L = batch_block * HW

    # ---- zero-padding validity masks for the 9 depthwise taps, tiled per image ----
    ii, jj = jnp.arange(H), jnp.arange(W)
    rows = []
    for ky in range(3):
        for kx in range(3):
            dy, dx = ky - 1, kx - 1
            rv = (ii + dy >= 0) & (ii + dy < H)
            cv = (jj + dx >= 0) & (jj + dx < W)
            rows.append((rv[:, None] & cv[None, :]).reshape(HW))
    mask9 = jnp.stack(rows, 0).astype(f32)              # (9, HW)
    mask9_t = jnp.tile(mask9, (1, batch_block))         # (9, L)

    # ---- lane-dense activation slab: (Cin_p, N*HW), images concatenated on lanes ----
    x_cl = jnp.transpose(x.reshape(N, Cin, HW), (1, 0, 2)).reshape(Cin, N * HW)
    x_cl = jnp.zeros((Cin_p, N * HW), x.dtype).at[:Cin].set(x_cl)

    operands = [x_cl]
    in_specs = [pl.BlockSpec((Cin_p, L), lambda n: (0, n))]
    if has_expand:
        operands += [w1_p, b1_p]
    operands += [wdw_p, b2_p, w3_p, b3_p, mask9_t]
    in_specs += [pl.BlockSpec(a.shape, lambda n: (0, 0)) for a in operands[1:]]

    kernel = functools.partial(
        _inverted_residual_kernel, W=W, L=L, use_res=use_res,
        has_expand=has_expand, compute_dtype=compute_dtype)

    # VMEM budget (bytes): double-buffered x/out slabs + constants + f32 temporaries.
    vmem_est = 4 * (2 * (Cin_p + Cout_p) * L            # x/out blocks (double-buffered)
                    + 4 * Cexp_p * L                     # y / acc / shifted / wk temps
                    + 2 * 9 * L                          # tap masks
                    + 2 * (Cexp_p * Cin_p + Cout_p * Cexp_p
                           + 9 * Cexp_p + 3 * Cexp_p + Cout_p))
    vmem_limit = int(min(64 << 20, max(2 * vmem_est, 32 << 20)))   # v7x-safe cap

    out_flat = pl.pallas_call(
        kernel,
        out_shape=jax.ShapeDtypeStruct((Cout_p, N * HW), x.dtype),
        grid_spec=pltpu.PrefetchScalarGridSpec(
            num_scalar_prefetch=0,
            grid=grid,
            in_specs=in_specs,
            out_specs=pl.BlockSpec((Cout_p, L), lambda n: (0, n)),
        ),
        compiler_params=pltpu.CompilerParams(
            dimension_semantics=("parallel",),
            vmem_limit_bytes=vmem_limit),
    )(*operands)

    # ---- back to NCHW; 1x1 project/BN commute with spatial subsampling, so
    #      stride>1 is a plain strided slice here (no in-kernel gather/sel matmul) ----
    out = jnp.transpose(out_flat.reshape(Cout_p, N, H, W), (1, 0, 2, 3))[:, :Cout]
    if stride > 1:
        out = out[:, :, ::stride, ::stride]
    return out


def make_params(key, cin, cout, t):
    """Deterministic synthetic parameters in PyTorch layouts; BN eval mode."""
    cexp = cin * t
    ks = jax.random.split(key, 15)

    def bn(k0, k1, k2, k3, c):
        gamma = jax.random.uniform(k0, (c,), jnp.float32, 0.5, 1.5)
        beta = 0.1 * jax.random.normal(k1, (c,), jnp.float32)
        mean = 0.1 * jax.random.normal(k2, (c,), jnp.float32)
        var = jax.random.uniform(k3, (c,), jnp.float32, 0.5, 1.5)
        return gamma, beta, mean, var

    return dict(
        w1=0.3 * jax.random.normal(ks[0], (cexp, cin), jnp.float32),    # 1x1 expand
        bn1=bn(ks[1], ks[2], ks[3], ks[4], cexp),
        wdw=0.3 * jax.random.normal(ks[5], (cexp, 3, 3), jnp.float32),  # depthwise 3x3
        bn2=bn(ks[6], ks[7], ks[8], ks[9], cexp),
        w3=0.3 * jax.random.normal(ks[10], (cout, cexp), jnp.float32),  # 1x1 project
        bn3=bn(ks[11], ks[12], ks[13], ks[14], cout),
    )


def ref_forward(x, params, *, stride, use_res, has_expand, eps=1e-5):
    """Plain-JAX NCHW reference == the PyTorch module in eval mode."""
    def bn(y, p):
        gamma, beta, mean, var = p
        inv = (gamma / jnp.sqrt(var + eps))[None, :, None, None]
        return (y - mean[None, :, None, None]) * inv + beta[None, :, None, None]

    cexp = params["wdw"].shape[0]
    y = x
    if has_expand:
        y = jnp.einsum("nchw,ec->nehw", x, params["w1"])
        y = jnp.clip(bn(y, params["bn1"]), 0.0, 6.0)
    y = lax.conv_general_dilated(
        y, params["wdw"].reshape(cexp, 1, 3, 3),
        window_strides=(stride, stride), padding=((1, 1), (1, 1)),
        dimension_numbers=("NCHW", "OIHW", "NCHW"),
        feature_group_count=cexp)
    y = jnp.clip(bn(y, params["bn2"]), 0.0, 6.0)
    y = jnp.einsum("nchw,oc->nohw", y, params["w3"])
    y = bn(y, params["bn3"])
    if use_res:
        y = y + x
    return y


if __name__ == "__main__":
    key = jax.random.PRNGKey(0)
    kx1, kx2, kp1, kp2 = jax.random.split(key, 4)

    # Config 1: cin = cout = 4, t = 4, stride = 1 -> residual connection used.
    cin, cout, t, stride = 4, 4, 4, 1
    use_res = (stride == 1 and cin == cout)
    x = jax.random.normal(kx1, (2, cin, 16, 16), jnp.float32)
    params = make_params(kp1, cin, cout, t)
    out = inverted_residual(x, params, stride=stride, use_res=use_res,
                            has_expand=(t != 1))
    out = jax.block_until_ready(out)
    ref = ref_forward(x, params, stride=stride, use_res=use_res,
                      has_expand=(t != 1))
    assert out.shape == ref.shape == (2, cout, 16, 16)
    assert float(jnp.max(jnp.abs(out - ref))) < 1e-3

    # Config 2: cin = 4, cout = 8, t = 2, stride = 2 -> downsample, no residual.
    cin2, cout2, t2, stride2 = 4, 8, 2, 2
    x2 = jax.random.normal(kx2, (2, cin2, 16, 16), jnp.float32)
    params2 = make_params(kp2, cin2, cout2, t2)
    out2 = inverted_residual(x2, params2, stride=stride2, use_res=False,
                             has_expand=True)
    out2 = jax.block_until_ready(out2)
    ref2 = ref_forward(x2, params2, stride=stride2, use_res=False,
                       has_expand=True)
    assert out2.shape == ref2.shape == (2, cout2, 8, 8)
    assert float(jnp.max(jnp.abs(out2 - ref2))) < 1e-3

    print("KERNEL_OK")
</pallas_src>

<mosaic_0001>
module attributes {stable_mosaic.version = 11 : i64} {
  func.func @_inverted_residual_kernel(%arg0: i32, %arg1: memref<8x512xf32, #tpu.memory_space<vmem>>, %arg2: memref<16x8xf32, #tpu.memory_space<vmem>>, %arg3: memref<16x1xf32, #tpu.memory_space<vmem>>, %arg4: memref<16x9xf32, #tpu.memory_space<vmem>>, %arg5: memref<16x1xf32, #tpu.memory_space<vmem>>, %arg6: memref<8x16xf32, #tpu.memory_space<vmem>>, %arg7: memref<8x1xf32, #tpu.memory_space<vmem>>, %arg8: memref<9x512xf32, #tpu.memory_space<vmem>>, %arg9: memref<8x512xf32, #tpu.memory_space<vmem>>) attributes {dimension_semantics = [#tpu.dimension_semantics<parallel>], iteration_bounds = array<i64: 1>, scalar_prefetch = 0 : i64, scratch_operands = 0 : i64, tpu.core_type = #tpu.core_type<tc>, window_params = [{transform_indices = @transform_0, window_bounds = array<i64: 8, 512>}, {pipeline_mode = #tpu.pipeline_mode<synchronous>, transform_indices = @transform_1, window_bounds = array<i64: 16, 8>}, {pipeline_mode = #tpu.pipeline_mode<synchronous>, transform_indices = @transform_2, window_bounds = array<i64: 16, 1>}, {pipeline_mode = #tpu.pipeline_mode<synchronous>, transform_indices = @transform_3, window_bounds = array<i64: 16, 9>}, {pipeline_mode = #tpu.pipeline_mode<synchronous>, transform_indices = @transform_4, window_bounds = array<i64: 16, 1>}, {pipeline_mode = #tpu.pipeline_mode<synchronous>, transform_indices = @transform_5, window_bounds = array<i64: 8, 16>}, {pipeline_mode = #tpu.pipeline_mode<synchronous>, transform_indices = @transform_6, window_bounds = array<i64: 8, 1>}, {pipeline_mode = #tpu.pipeline_mode<synchronous>, transform_indices = @transform_7, window_bounds = array<i64: 9, 512>}, {transform_indices = @transform_8, window_bounds = array<i64: 8, 512>}]} {
    %c0 = arith.constant 0 : index
    %c0_0 = arith.constant 0 : index
    %0 = vector.load %arg1[%c0, %c0_0] : memref<8x512xf32, #tpu.memory_space<vmem>>, vector<8x512xf32>
    %c0_1 = arith.constant 0 : index
    %c0_2 = arith.constant 0 : index
    %1 = vector.load %arg4[%c0_1, %c0_2] : memref<16x9xf32, #tpu.memory_space<vmem>>, vector<16x9xf32>
    %c0_3 = arith.constant 0 : index
    %c0_4 = arith.constant 0 : index
    %2 = vector.load %arg5[%c0_3, %c0_4] : memref<16x1xf32, #tpu.memory_space<vmem>>, vector<16x1xf32>
    %c0_5 = arith.constant 0 : index
    %c0_6 = arith.constant 0 : index
    %3 = vector.load %arg6[%c0_5, %c0_6] : memref<8x16xf32, #tpu.memory_space<vmem>>, vector<8x16xf32>
    %c0_7 = arith.constant 0 : index
    %c0_8 = arith.constant 0 : index
    %4 = vector.load %arg7[%c0_7, %c0_8] : memref<8x1xf32, #tpu.memory_space<vmem>>, vector<8x1xf32>
    %c0_9 = arith.constant 0 : index
    %c0_10 = arith.constant 0 : index
    %5 = vector.load %arg8[%c0_9, %c0_10] : memref<9x512xf32, #tpu.memory_space<vmem>>, vector<9x512xf32>
    %c0_11 = arith.constant 0 : index
    %c0_12 = arith.constant 0 : index
    %6 = vector.load %arg2[%c0_11, %c0_12] : memref<16x8xf32, #tpu.memory_space<vmem>>, vector<16x8xf32>
    %c0_13 = arith.constant 0 : index
    %c0_14 = arith.constant 0 : index
    %7 = vector.load %arg3[%c0_13, %c0_14] : memref<16x1xf32, #tpu.memory_space<vmem>>, vector<16x1xf32>
    %cst = arith.constant dense<0.000000e+00> : vector<16x512xf32>
    %8 = tpu.matmul %6, %0, %cst {dimension_numbers = #tpu.dot_dimension_numbers<[1], [0], [0], [1], [0, 0, 1, 1], [], []>} : vector<16x8xf32>, vector<8x512xf32>, vector<16x512xf32> -> vector<16x512xf32>
    %9 = vector.broadcast %7 : vector<16x1xf32> to vector<16x512xf32>
    %10 = arith.addf %8, %9 : vector<16x512xf32>
    %cst_15 = arith.constant 0.000000e+00 : f32
    %cst_16 = arith.constant 6.000000e+00 : f32
    %11 = vector.broadcast %cst_15 : f32 to vector<16x512xf32>
    %12 = arith.maximumf %11, %10 : vector<16x512xf32>
    %13 = vector.broadcast %cst_16 : f32 to vector<16x512xf32>
    %14 = arith.minimumf %13, %12 : vector<16x512xf32>
    %15 = vector.extract_strided_slice %1 {offsets = [0, 4], sizes = [16, 1], strides = [1, 1]} : vector<16x9xf32> to vector<16x1xf32>
    %16 = vector.broadcast %15 : vector<16x1xf32> to vector<16x512xf32>
    %17 = arith.mulf %14, %16 : vector<16x512xf32>
    %18 = vector.extract_strided_slice %1 {offsets = [0, 0], sizes = [16, 1], strides = [1, 1]} : vector<16x9xf32> to vector<16x1xf32>
    %19 = vector.extract_strided_slice %5 {offsets = [0, 0], sizes = [1, 512], strides = [1, 1]} : vector<9x512xf32> to vector<1x512xf32>
    %20 = vector.broadcast %18 : vector<16x1xf32> to vector<16x512xf32>
    %21 = vector.broadcast %19 : vector<1x512xf32> to vector<16x512xf32>
    %22 = arith.mulf %20, %21 : vector<16x512xf32>
    %c17_i32 = arith.constant 17 : i32
    %23 = tpu.dynamic_rotate %14 by %c17_i32 dim 1 : vector<16x512xf32>, i32 -> vector<16x512xf32>
    %24 = arith.mulf %23, %22 : vector<16x512xf32>
    %25 = arith.addf %17, %24 : vector<16x512xf32>
    %26 = vector.extract_strided_slice %1 {offsets = [0, 1], sizes = [16, 1], strides = [1, 1]} : vector<16x9xf32> to vector<16x1xf32>
    %27 = vector.extract_strided_slice %5 {offsets = [1, 0], sizes = [1, 512], strides = [1, 1]} : vector<9x512xf32> to vector<1x512xf32>
    %28 = vector.broadcast %26 : vector<16x1xf32> to vector<16x512xf32>
    %29 = vector.broadcast %27 : vector<1x512xf32> to vector<16x512xf32>
    %30 = arith.mulf %28, %29 : vector<16x512xf32>
    %c16_i32 = arith.constant 16 : i32
    %31 = tpu.dynamic_rotate %14 by %c16_i32 dim 1 : vector<16x512xf32>, i32 -> vector<16x512xf32>
    %32 = arith.mulf %31, %30 : vector<16x512xf32>
    %33 = arith.addf %25, %32 : vector<16x512xf32>
    %34 = vector.extract_strided_slice %1 {offsets = [0, 2], sizes = [16, 1], strides = [1, 1]} : vector<16x9xf32> to vector<16x1xf32>
    %35 = vector.extract_strided_slice %5 {offsets = [2, 0], sizes = [1, 512], strides = [1, 1]} : vector<9x512xf32> to vector<1x512xf32>
    %36 = vector.broadcast %34 : vector<16x1xf32> to vector<16x512xf32>
    %37 = vector.broadcast %35 : vector<1x512xf32> to vector<16x512xf32>
    %38 = arith.mulf %36, %37 : vector<16x512xf32>
    %c15_i32 = arith.constant 15 : i32
    %39 = tpu.dynamic_rotate %14 by %c15_i32 dim 1 : vector<16x512xf32>, i32 -> vector<16x512xf32>
    %40 = arith.mulf %39, %38 : vector<16x512xf32>
    %41 = arith.addf %33, %40 : vector<16x512xf32>
    %42 = vector.extract_strided_slice %1 {offsets = [0, 3], sizes = [16, 1], strides = [1, 1]} : vector<16x9xf32> to vector<16x1xf32>
    %43 = vector.extract_strided_slice %5 {offsets = [3, 0], sizes = [1, 512], strides = [1, 1]} : vector<9x512xf32> to vector<1x512xf32>
    %44 = vector.broadcast %42 : vector<16x1xf32> to vector<16x512xf32>
    %45 = vector.broadcast %43 : vector<1x512xf32> to vector<16x512xf32>
    %46 = arith.mulf %44, %45 : vector<16x512xf32>
    %c1_i32 = arith.constant 1 : i32
    %47 = tpu.dynamic_rotate %14 by %c1_i32 dim 1 : vector<16x512xf32>, i32 -> vector<16x512xf32>
    %48 = arith.mulf %47, %46 : vector<16x512xf32>
    %49 = arith.addf %41, %48 : vector<16x512xf32>
    %50 = vector.extract_strided_slice %1 {offsets = [0, 5], sizes = [16, 1], strides = [1, 1]} : vector<16x9xf32> to vector<16x1xf32>
    %51 = vector.extract_strided_slice %5 {offsets = [5, 0], sizes = [1, 512], strides = [1, 1]} : vector<9x512xf32> to vector<1x512xf32>
    %52 = vector.broadcast %50 : vector<16x1xf32> to vector<16x512xf32>
    %53 = vector.broadcast %51 : vector<1x512xf32> to vector<16x512xf32>
    %54 = arith.mulf %52, %53 : vector<16x512xf32>
    %c511_i32 = arith.constant 511 : i32
    %55 = tpu.dynamic_rotate %14 by %c511_i32 dim 1 : vector<16x512xf32>, i32 -> vector<16x512xf32>
    %56 = arith.mulf %55, %54 : vector<16x512xf32>
    %57 = arith.addf %49, %56 : vector<16x512xf32>
    %58 = vector.extract_strided_slice %1 {offsets = [0, 6], sizes = [16, 1], strides = [1, 1]} : vector<16x9xf32> to vector<16x1xf32>
    %59 = vector.extract_strided_slice %5 {offsets = [6, 0], sizes = [1, 512], strides = [1, 1]} : vector<9x512xf32> to vector<1x512xf32>
    %60 = vector.broadcast %58 : vector<16x1xf32> to vector<16x512xf32>
    %61 = vector.broadcast %59 : vector<1x512xf32> to vector<16x512xf32>
    %62 = arith.mulf %60, %61 : vector<16x512xf32>
    %c497_i32 = arith.constant 497 : i32
    %63 = tpu.dynamic_rotate %14 by %c497_i32 dim 1 : vector<16x512xf32>, i32 -> vector<16x512xf32>
    %64 = arith.mulf %63, %62 : vector<16x512xf32>
    %65 = arith.addf %57, %64 : vector<16x512xf32>
    %66 = vector.extract_strided_slice %1 {offsets = [0, 7], sizes = [16, 1], strides = [1, 1]} : vector<16x9xf32> to vector<16x1xf32>
    %67 = vector.extract_strided_slice %5 {offsets = [7, 0], sizes = [1, 512], strides = [1, 1]} : vector<9x512xf32> to vector<1x512xf32>
    %68 = vector.broadcast %66 : vector<16x1xf32> to vector<16x512xf32>
    %69 = vector.broadcast %67 : vector<1x512xf32> to vector<16x512xf32>
    %70 = arith.mulf %68, %69 : vector<16x512xf32>
    %c496_i32 = arith.constant 496 : i32
    %71 = tpu.dynamic_rotate %14 by %c496_i32 dim 1 : vector<16x512xf32>, i32 -> vector<16x512xf32>
    %72 = arith.mulf %71, %70 : vector<16x512xf32>
    %73 = arith.addf %65, %72 : vector<16x512xf32>
    %74 = vector.extract_strided_slice %1 {offsets = [0, 8], sizes = [16, 1], strides = [1, 1]} : vector<16x9xf32> to vector<16x1xf32>
    %75 = vector.extract_strided_slice %5 {offsets = [8, 0], sizes = [1, 512], strides = [1, 1]} : vector<9x512xf32> to vector<1x512xf32>
    %76 = vector.broadcast %74 : vector<16x1xf32> to vector<16x512xf32>
    %77 = vector.broadcast %75 : vector<1x512xf32> to vector<16x512xf32>
    %78 = arith.mulf %76, %77 : vector<16x512xf32>
    %c495_i32 = arith.constant 495 : i32
    %79 = tpu.dynamic_rotate %14 by %c495_i32 dim 1 : vector<16x512xf32>, i32 -> vector<16x512xf32>
    %80 = arith.mulf %79, %78 : vector<16x512xf32>
    %81 = arith.addf %73, %80 : vector<16x512xf32>
    %82 = vector.broadcast %2 : vector<16x1xf32> to vector<16x512xf32>
    %83 = arith.addf %81, %82 : vector<16x512xf32>
    %cst_17 = arith.constant 0.000000e+00 : f32
    %cst_18 = arith.constant 6.000000e+00 : f32
    %84 = vector.broadcast %cst_17 : f32 to vector<16x512xf32>
    %85 = arith.maximumf %84, %83 : vector<16x512xf32>
    %86 = vector.broadcast %cst_18 : f32 to vector<16x512xf32>
    %87 = arith.minimumf %86, %85 : vector<16x512xf32>
    %cst_19 = arith.constant dense<0.000000e+00> : vector<8x512xf32>
    %88 = tpu.matmul %3, %87, %cst_19 {dimension_numbers = #tpu.dot_dimension_numbers<[1], [0], [0], [1], [0, 0, 1, 1], [], []>} : vector<8x16xf32>, vector<16x512xf32>, vector<8x512xf32> -> vector<8x512xf32>
    %89 = vector.broadcast %4 : vector<8x1xf32> to vector<8x512xf32>
    %90 = arith.addf %88, %89 : vector<8x512xf32>
    %91 = arith.addf %90, %0 : vector<8x512xf32>
    %c0_20 = arith.constant 0 : index
    %c0_21 = arith.constant 0 : index
    %92 = vector.load %arg9[%c0_20, %c0_21] : memref<8x512xf32, #tpu.memory_space<vmem>>, vector<8x512xf32>
    tpu.vector_store %arg9[%c0_20, %c0_21], %91 {strides = array<i32>} : memref<8x512xf32, #tpu.memory_space<vmem>>, vector<8x512xf32>,
    return
  }
  func.func @transform_0(%arg0: i32) -> (i32, i32) {
    %c0_i32 = arith.constant 0 : i32
    %c0_i32_0 = arith.constant 0 : i32
    return %c0_i32, %arg0 : i32, i32
  }
  func.func @transform_1(%arg0: i32) -> (i32, i32) {
    %c0_i32 = arith.constant 0 : i32
    %c0_i32_0 = arith.constant 0 : i32
    %c0_i32_1 = arith.constant 0 : i32
    return %c0_i32, %c0_i32_0 : i32, i32
  }
  func.func @transform_2(%arg0: i32) -> (i32, i32) {
    %c0_i32 = arith.constant 0 : i32
    %c0_i32_0 = arith.constant 0 : i32
    %c0_i32_1 = arith.constant 0 : i32
    return %c0_i32, %c0_i32_0 : i32, i32
  }
  func.func @transform_3(%arg0: i32) -> (i32, i32) {
    %c0_i32 = arith.constant 0 : i32
    %c0_i32_0 = arith.constant 0 : i32
    %c0_i32_1 = arith.constant 0 : i32
    return %c0_i32, %c0_i32_0 : i32, i32
  }
  func.func @transform_4(%arg0: i32) -> (i32, i32) {
    %c0_i32 = arith.constant 0 : i32
    %c0_i32_0 = arith.constant 0 : i32
    %c0_i32_1 = arith.constant 0 : i32
    return %c0_i32, %c0_i32_0 : i32, i32
  }
  func.func @transform_5(%arg0: i32) -> (i32, i32) {
    %c0_i32 = arith.constant 0 : i32
    %c0_i32_0 = arith.constant 0 : i32
    %c0_i32_1 = arith.constant 0 : i32
    return %c0_i32, %c0_i32_0 : i32, i32
  }
  func.func @transform_6(%arg0: i32) -> (i32, i32) {
    %c0_i32 = arith.constant 0 : i32
    %c0_i32_0 = arith.constant 0 : i32
    %c0_i32_1 = arith.constant 0 : i32
    return %c0_i32, %c0_i32_0 : i32, i32
  }
  func.func @transform_7(%arg0: i32) -> (i32, i32) {
    %c0_i32 = arith.constant 0 : i32
    %c0_i32_0 = arith.constant 0 : i32
    %c0_i32_1 = arith.constant 0 : i32
    return %c0_i32, %c0_i32_0 : i32, i32
  }
  func.func @transform_8(%arg0: i32) -> (i32, i32) {
    %c0_i32 = arith.constant 0 : i32
    %c0_i32_0 = arith.constant 0 : i32
    return %c0_i32, %arg0 : i32, i32
  }
}

</mosaic_0001>

<llo_original>
// kernel: tpu_custom_call.1
$region0: #{tpu_custom_call.1}
  #allocation0 [shape = 'u32[]', space=smem, size = 0x4, offset = 0x4, fixed_abs, tag = 'smem constant byte address 0x4 - core index']
  #allocation1 [shape = 'u32[144,128]{1,0:T(1,128)}', space=vmem, size = 0x12000, scoped, tag = 'internal scratch']
  %s0 = inlined_call_operand.hbm [shape: f32[8,512], index: 0, kind: input, shape index: {}]
  %s1 = inlined_call_operand.vmem [shape: f32[16,8], index: 1, kind: input, shape index: {}]
  %s2 = inlined_call_operand.vmem [shape: f32[16,1], index: 2, kind: input, shape index: {}]
  %s3 = inlined_call_operand.vmem [shape: f32[16,9], index: 3, kind: input, shape index: {}]
  %s4 = inlined_call_operand.vmem [shape: f32[16,1], index: 4, kind: input, shape index: {}]
  %s5 = inlined_call_operand.vmem [shape: f32[8,16], index: 5, kind: input, shape index: {}]
  %s6 = inlined_call_operand.vmem [shape: f32[8,1], index: 6, kind: input, shape index: {}]
  %s7 = inlined_call_operand.vmem [shape: f32[9,512], index: 7, kind: input, shape index: {}]
  %s8 = inlined_call_operand.hbm [shape: f32[8,512], index: 8, kind: output, shape index: {}]
  %s9 = sld [smem:[#allocation0]]
  $region46: #{tpu_custom_call.1} parent=0
    _
  %s11 = ssub.s32 1, %s9
  %s12 = scalar_select 0, %s11, %s9
  $region1: #{tpu_custom_call.1} parent=0
    #allocation2 [shape = 'u8[16384]{0}', space=vmem, size = 0x4000, scoped, tag = 'input window, operand 0, single buffered']
    #allocation3 [shape = 's32[1]{0}', space=sflag, size = 0x4, scoped, tag = 'scoped memory for tpu_custom_call.1']
    #allocation4 [shape = 's32[1]{0}', space=sflag, size = 0x4, scoped, tag = 'scoped memory for tpu_custom_call.1']
    #allocation5 [shape = 'u8[16384]{0}', space=vmem, size = 0x4000, scoped, tag = 'output window, operand 0, single buffered']
    %13 = vsyncpa [#allocation3], 0
    %14 = vsyncpa [#allocation4], 0
    // Predicated region
    $region2: #{tpu_custom_call.1} parent=1 // pred_check
      _
    $region3: #{tpu_custom_call.1} parent=1 // pred_check_branch
      %16 = sbr.rel (0) target = $region5
    $region4: #{tpu_custom_call.1} parent=1 // pred_region
      %s18 = ssub.s32 512, 512
      %19 = vsyncadd [#allocation3], %s18
      %s21 = sshll.u32 [#allocation2], 4
      %s22 = int_to_ptr.vmem [resolvable:$true] %s21
      %24 = dma.hbm_to_vmem [thread:$0]  %s0, 512, %s22, [#allocation3]
    $region5: #{tpu_custom_call.1} parent=1 // pred_fallthru
      _
    // Predicated region
    $region6: #{tpu_custom_call.1} parent=1 // pred_check
      _
    $region7: #{tpu_custom_call.1} parent=1 // pred_check_branch
      %26 = sbr.rel (0) target = $region9
    $region8: #{tpu_custom_call.1} parent=1 // pred_region
      _
    $region9: #{tpu_custom_call.1} parent=1 // pred_fallthru
      _
    // Predicated region
    $region10: #{tpu_custom_call.1} parent=1 // pred_check
      _
    $region11: #{tpu_custom_call.1} parent=1 // pred_check_branch
      %28 = sbr.rel (0) target = $region13
    $region12: #{tpu_custom_call.1} parent=1 // pred_region
      _
    $region13: #{tpu_custom_call.1} parent=1 // pred_fallthru
      _
    // Predicated region
    $region14: #{tpu_custom_call.1} parent=1 // pred_check
      _
    $region15: #{tpu_custom_call.1} parent=1 // pred_check_branch
      %30 = sbr.rel (0) target = $region17
    $region16: #{tpu_custom_call.1} parent=1 // pred_region
      _
    $region17: #{tpu_custom_call.1} parent=1 // pred_fallthru
      _
    // Predicated region
    $region18: #{tpu_custom_call.1} parent=1 // pred_check
      _
    $region19: #{tpu_custom_call.1} parent=1 // pred_check_branch
      %32 = sbr.rel (0) target = $region21
    $region20: #{tpu_custom_call.1} parent=1 // pred_region
      _
    $region21: #{tpu_custom_call.1} parent=1 // pred_fallthru
      _
    // Predicated region
    $region22: #{tpu_custom_call.1} parent=1 // pred_check
      _
    $region23: #{tpu_custom_call.1} parent=1 // pred_check_branch
      %34 = sbr.rel (0) target = $region25
    $region24: #{tpu_custom_call.1} parent=1 // pred_region
      _
    $region25: #{tpu_custom_call.1} parent=1 // pred_fallthru
      _
    // Predicated region
    $region26: #{tpu_custom_call.1} parent=1 // pred_check
      _
    $region27: #{tpu_custom_call.1} parent=1 // pred_check_branch
      %36 = sbr.rel (0) target = $region29
    $region28: #{tpu_custom_call.1} parent=1 // pred_region
      _
    $region29: #{tpu_custom_call.1} parent=1 // pred_fallthru
      _
    // Predicated region
    $region30: #{tpu_custom_call.1} parent=1 // pred_check
      _
    $region31: #{tpu_custom_call.1} parent=1 // pred_check_branch
      %38 = sbr.rel (0) target = $region33
    $region32: #{tpu_custom_call.1} parent=1 // pred_region
      _
    $region33: #{tpu_custom_call.1} parent=1 // pred_fallthru
      _
    // Predicated region
    $region34: #{tpu_custom_call.1} parent=1 // pred_check
      _
    $region35: #{tpu_custom_call.1} parent=1 // pred_check_branch
      %40 = sbr.rel (0) target = $region37
    $region36: #{tpu_custom_call.1} parent=1 // pred_region
      %41 = dma.done [#allocation3], 512
    $region37: #{tpu_custom_call.1} parent=1 // pred_fallthru
      _
    %v42 = vld [vmem:[#allocation2] sm:$0xff]
    %v43 = vld [vmem:[#allocation2 + $0x8] sm:$0xff]
    %v44 = vld [vmem:[#allocation2 + $0x10] sm:$0xff]
    %v45 = vld [vmem:[#allocation2 + $0x18] sm:$0xff]
    %v46 = vld [vmem:[%s3] sm:$0xff]
    %v47 = vld [vmem:[%s3 + $0x8] sm:$0xff]
    %v48 = vld [vmem:[%s4] sm:$0xff]
    %v49 = vld [vmem:[%s4 + $0x8] sm:$0xff]
    %v50 = vld [vmem:[%s5] sm:$0xff]
    %v51 = vld [vmem:[%s6] sm:$0xff]
    %v52 = vld [vmem:[%s7] sm:$0xff]
    %v53 = vld [vmem:[%s7 + $0x8] sm:$0xff]
    %v54 = vld [vmem:[%s7 + $0x10] sm:$0xff]
    %v55 = vld [vmem:[%s7 + $0x18] sm:$0xff]
    %v56 = vld [vmem:[%s7 + $0x20] sm:$0x1]
    %v57 = vld [vmem:[%s7 + $0x28] sm:$0x1]
    %v58 = vld [vmem:[%s7 + $0x30] sm:$0x1]
    %v59 = vld [vmem:[%s7 + $0x38] sm:$0x1]
    %v60 = vld [vmem:[%s1] sm:$0xff]
    %v61 = vld [vmem:[%s1 + $0x8] sm:$0xff]
    %v62 = vld [vmem:[%s2] sm:$0xff]
    %v63 = vld [vmem:[%s2 + $0x8] sm:$0xff]
    %65 = vset.pattern.permute.xlu0 0
    %66 = vperm.xlu0 %65, %v62
    %v67 = vpop.permute.xlu0 %66
    %70 = vset.pattern.permute.xlu0 0
    %71 = vperm.xlu0 %70, %v63
    %v72 = vpop.permute.xlu0 %71
    %vm74 = vcmask 64512
    %v76 = vsel %vm74, %v60, 0
    %v79 = vsel %vm74, %v61, 0
    %81 = vmatprep.subr.mxu0 %v43
    %82 = vmatpush1.msra.mxu0 %v42
    %83 = vmatprep.subr.mxu0 0.0
    %84 = vmatpush1.msra.mxu0 0.0
    %85 = vmatprep.subr.mxu0 0.0
    %86 = vmatpush1.msra.mxu0 0.0
    %87 = vmatprep.subr.mxu0 0.0
    %88 = vmatpush1.msra.mxu0 0.0
    %89 = vmatprep.subr.mxu0 0.0
    %90 = vmatpush1.msra.mxu0 0.0
    %91 = vmatprep.subr.mxu0 0.0
    %92 = vmatpush1.msra.mxu0 0.0
    %93 = vmatprep.subr.mxu0 0.0
    %94 = vmatpush1.msra.mxu0 0.0
    %95 = vmatprep.subr.mxu0 0.0
    %96 = vmatpush1.msra.mxu0 0.0
    %97 = vmatprep.subr.mxu0 0.0
    %98 = vmatpush1.msra.mxu0 0.0
    %99 = vmatprep.subr.mxu0 0.0
    %100 = vmatpush1.msra.mxu0 0.0
    %101 = vmatprep.subr.mxu0 0.0
    %102 = vmatpush1.msra.mxu0 0.0
    %103 = vmatprep.subr.mxu0 0.0
    %104 = vmatpush1.msra.mxu0 0.0
    %105 = vmatprep.subr.mxu0 0.0
    %106 = vmatpush1.msra.mxu0 0.0
    %107 = vmatprep.subr.mxu0 0.0
    %108 = vmatpush1.msra.mxu0 0.0
    %109 = vmatprep.subr.mxu0 0.0
    %110 = vmatpush1.msra.mxu0 0.0
    %111 = vmatprep.subr.mxu0 0.0
    %112 = vmatpush1.msra.mxu0 0.0
    %113 = vmatprep.subr.mxu0 0.0
    %114 = vmatpush1.msra.mxu0 0.0
    %115 = vmatprep.subr.mxu0 0.0
    %116 = vmatpush1.msra.mxu0 0.0
    %117 = vmatprep.subr.mxu0 0.0
    %118 = vmatpush1.msra.mxu0 0.0
    %119 = vmatprep.subr.mxu0 0.0
    %120 = vmatpush1.msra.mxu0 0.0
    %121 = vmatprep.subr.mxu0 0.0
    %122 = vmatpush1.msra.mxu0 0.0
    %123 = vmatprep.subr.mxu0 0.0
    %124 = vmatpush1.msra.mxu0 0.0
    %125 = vmatprep.subr.mxu0 0.0
    %126 = vmatpush1.msra.mxu0 0.0
    %127 = vmatprep.subr.mxu0 0.0
    %128 = vmatpush1.msra.mxu0 0.0
    %129 = vmatprep.subr.mxu0 0.0
    %130 = vmatpush1.msra.mxu0 0.0
    %131 = vmatprep.subr.mxu0 0.0
    %132 = vmatpush1.msra.mxu0 0.0
    %133 = vmatprep.subr.mxu0 0.0
    %134 = vmatpush1.msra.mxu0 0.0
    %135 = vmatprep.subr.mxu0 0.0
    %136 = vmatpush1.msra.mxu0 0.0
    %137 = vmatprep.subr.mxu0 0.0
    %138 = vmatpush1.msra.mxu0 0.0
    %139 = vmatprep.subr.mxu0 0.0
    %140 = vmatpush1.msra.mxu0 0.0
    %141 = vmatprep.subr.mxu0 0.0
    %142 = vmatpush1.msra.mxu0 0.0
    %143 = vmatprep.subr.mxu0 0.0
    %144 = vmatpush1.msra.mxu0 0.0
    %145 = vmatprep.mubr.f32.mxu0 0.0
    %146 = vmatmul.mubr.f32.gmra.mrb[0].mxu0 %v76
    %v147 = vpop.f32.mrb[0].mxu0
    %v148 = vadd.f32 %v67, %v147
    %v149 = vpop.f32.mrb[0].mxu0
    %v150 = vadd.f32 %v67, %v149
    %151 = vmatprep.mubr.f32.mxu0 0.0
    %152 = vmatmul.mubr.f32.gmra.mrb[0].mxu0 %v79
    %v153 = vpop.f32.mrb[0].mxu0
    %v154 = vadd.f32 %v72, %v153
    %v155 = vpop.f32.mrb[0].mxu0
    %v156 = vadd.f32 %v72, %v155
    %157 = vdwg.mxu0
    %158 = vmatprep.subr.mxu0 %v45
    %159 = vmatpush1.msra.mxu0 %v44
    %160 = vmatprep.subr.mxu0 0.0
    %161 = vmatpush1.msra.mxu0 0.0
    %162 = vmatprep.subr.mxu0 0.0
    %163 = vmatpush1.msra.mxu0 0.0
    %164 = vmatprep.subr.mxu0 0.0
    %165 = vmatpush1.msra.mxu0 0.0
    %166 = vmatprep.subr.mxu0 0.0
    %167 = vmatpush1.msra.mxu0 0.0
    %168 = vmatprep.subr.mxu0 0.0
    %169 = vmatpush1.msra.mxu0 0.0
    %170 = vmatprep.subr.mxu0 0.0
    %171 = vmatpush1.msra.mxu0 0.0
    %172 = vmatprep.subr.mxu0 0.0
    %173 = vmatpush1.msra.mxu0 0.0
    %174 = vmatprep.subr.mxu0 0.0
    %175 = vmatpush1.msra.mxu0 0.0
    %176 = vmatprep.subr.mxu0 0.0
    %177 = vmatpush1.msra.mxu0 0.0
    %178 = vmatprep.subr.mxu0 0.0
    %179 = vmatpush1.msra.mxu0 0.0
    %180 = vmatprep.subr.mxu0 0.0
    %181 = vmatpush1.msra.mxu0 0.0
    %182 = vmatprep.subr.mxu0 0.0
    %183 = vmatpush1.msra.mxu0 0.0
    %184 = vmatprep.subr.mxu0 0.0
    %185 = vmatpush1.msra.mxu0 0.0
    %186 = vmatprep.subr.mxu0 0.0
    %187 = vmatpush1.msra.mxu0 0.0
    %188 = vmatprep.subr.mxu0 0.0
    %189 = vmatpush1.msra.mxu0 0.0
    %190 = vmatprep.subr.mxu0 0.0
    %191 = vmatpush1.msra.mxu0 0.0
    %192 = vmatprep.subr.mxu0 0.0
    %193 = vmatpush1.msra.mxu0 0.0
    %194 = vmatprep.subr.mxu0 0.0
    %195 = vmatpush1.msra.mxu0 0.0
    %196 = vmatprep.subr.mxu0 0.0
    %197 = vmatpush1.msra.mxu0 0.0
    %198 = vmatprep.subr.mxu0 0.0
    %199 = vmatpush1.msra.mxu0 0.0
    %200 = vmatprep.subr.mxu0 0.0
    %201 = vmatpush1.msra.mxu0 0.0
    %202 = vmatprep.subr.mxu0 0.0
    %203 = vmatpush1.msra.mxu0 0.0
    %204 = vmatprep.subr.mxu0 0.0
    %205 = vmatpush1.msra.mxu0 0.0
    %206 = vmatprep.subr.mxu0 0.0
    %207 = vmatpush1.msra.mxu0 0.0
    %208 = vmatprep.subr.mxu0 0.0
    %209 = vmatpush1.msra.mxu0 0.0
    %210 = vmatprep.subr.mxu0 0.0
    %211 = vmatpush1.msra.mxu0 0.0
    %212 = vmatprep.subr.mxu0 0.0
    %213 = vmatpush1.msra.mxu0 0.0
    %214 = vmatprep.subr.mxu0 0.0
    %215 = vmatpush1.msra.mxu0 0.0
    %216 = vmatprep.subr.mxu0 0.0
    %217 = vmatpush1.msra.mxu0 0.0
    %218 = vmatprep.subr.mxu0 0.0
    %219 = vmatpush1.msra.mxu0 0.0
    %220 = vmatprep.subr.mxu0 0.0
    %221 = vmatpush1.msra.mxu0 0.0
    %222 = vmatprep.mubr.f32.mxu0 0.0
    %223 = vmatmul.mubr.f32.gmra.mrb[0].mxu0 %v76
    %v224 = vpop.f32.mrb[0].mxu0
    %v225 = vadd.f32 %v67, %v224
    %v226 = vpop.f32.mrb[0].mxu0
    %v227 = vadd.f32 %v67, %v226
    %228 = vmatprep.mubr.f32.mxu0 0.0
    %229 = vmatmul.mubr.f32.gmra.mrb[0].mxu0 %v79
    %v230 = vpop.f32.mrb[0].mxu0
    %v231 = vadd.f32 %v72, %v230
    %v232 = vpop.f32.mrb[0].mxu0
    %v233 = vadd.f32 %v72, %v232
    %234 = vdwg.mxu0
    %v235 = vmax.f32 %v148, 0.0
    %v236 = vmax.f32 %v150, 0.0
    %v237 = vmax.f32 %v225, 0.0
    %v238 = vmax.f32 %v227, 0.0
    %v239 = vmax.f32 %v154, 0.0
    %v240 = vmax.f32 %v156, 0.0
    %v241 = vmax.f32 %v231, 0.0
    %v242 = vmax.f32 %v233, 0.0
    %v243 = vmin.f32 %v235, 6.0
    %v244 = vmin.f32 %v236, 6.0
    %v245 = vmin.f32 %v237, 6.0
    %v246 = vmin.f32 %v238, 6.0
    %v247 = vmin.f32 %v239, 6.0
    %v248 = vmin.f32 %v240, 6.0
    %v249 = vmin.f32 %v241, 6.0
    %v250 = vmin.f32 %v242, 6.0
    %252 = vset.pattern.permute.xlu0 4
    %253 = vperm.xlu0 %252, %v46
    %v254 = vpop.permute.xlu0 %253
    %257 = vset.pattern.permute.xlu0 4
    %258 = vperm.xlu0 %257, %v47
    %v259 = vpop.permute.xlu0 %258
    %v261 = vmul.f32 %v243, %v254
    %v262 = vmul.f32 %v244, %v254
    %v263 = vmul.f32 %v245, %v254
    %v264 = vmul.f32 %v246, %v254
    %v265 = vmul.f32 %v247, %v259
    %v266 = vmul.f32 %v248, %v259
    %v267 = vmul.f32 %v249, %v259
    %v268 = vmul.f32 %v250, %v259
    %269 = vset.pattern.permute.xlu0 0
    %270 = vperm.xlu0 %269, %v46
    %v271 = vpop.permute.xlu0 %270
    %273 = vset.pattern.permute.xlu0 0
    %274 = vperm.xlu0 %273, %v47
    %v275 = vpop.permute.xlu0 %274
    %v277 = vlaneseq
    %v278 = vshrl.u32 %v277, 7
    %v279 = vsub.s32 0, %v278
    %v280 = vrot.slane %v52, %v279
    %v281 = vlaneseq
    %v282 = vshrl.u32 %v281, 7
    %v283 = vsub.s32 0, %v282
    %v284 = vrot.slane %v53, %v283
    %v285 = vlaneseq
    %v286 = vshrl.u32 %v285, 7
    %v287 = vsub.s32 0, %v286
    %v288 = vrot.slane %v54, %v287
    %v289 = vlaneseq
    %v290 = vshrl.u32 %v289, 7
    %v291 = vsub.s32 0, %v290
    %v292 = vrot.slane %v55, %v291
    %v293 = vmul.f32 %v271, %v280
    %v294 = vmul.f32 %v271, %v284
    %v295 = vmul.f32 %v271, %v288
    %v296 = vmul.f32 %v271, %v292
    %v297 = vmul.f32 %v275, %v280
    %v298 = vmul.f32 %v275, %v284
    %v299 = vmul.f32 %v275, %v288
    %v300 = vmul.f32 %v275, %v292
    %301 = vrot.lane.b32.xlu0 %v243, 17
    %v302 = vpop.permute.xlu0 %301
    %303 = vrot.lane.b32.xlu0 %v247, 17
    %v304 = vpop.permute.xlu0 %303
    %305 = vrot.lane.b32.xlu0 %v244, 17
    %v306 = vpop.permute.xlu0 %305
    %307 = vrot.lane.b32.xlu0 %v248, 17
    %v308 = vpop.permute.xlu0 %307
    %309 = vrot.lane.b32.xlu0 %v245, 17
    %v310 = vpop.permute.xlu0 %309
    %311 = vrot.lane.b32.xlu0 %v249, 17
    %v312 = vpop.permute.xlu0 %311
    %313 = vrot.lane.b32.xlu0 %v246, 17
    %v314 = vpop.permute.xlu0 %313
    %315 = vrot.lane.b32.xlu0 %v250, 17
    %v316 = vpop.permute.xlu0 %315
    %v317 = vlaneseq
    %v318 = vand.u32 %v317, 127
    %vm319 = vcmp.lt.s32.totalorder %v318, 17
    %v320 = vsel %vm319, %v310, %v314
    %v321 = vsel %vm319, %v312, %v316
    %v322 = vsel %vm319, %v306, %v310
    %v323 = vsel %vm319, %v308, %v312
    %v324 = vsel %vm319, %v302, %v306
    %v325 = vsel %vm319, %v304, %v308
    %v326 = vsel %vm319, %v314, %v302
    %v327 = vsel %vm319, %v316, %v304
    %v328 = vmul.f32 %v326, %v293
    %v329 = vmul.f32 %v324, %v294
    %v330 = vmul.f32 %v322, %v295
    %v331 = vmul.f32 %v320, %v296
    %v332 = vmul.f32 %v327, %v297
    %v333 = vmul.f32 %v325, %v298
    %v334 = vmul.f32 %v323, %v299
    %v335 = vmul.f32 %v321, %v300
    %v336 = vadd.f32 %v261, %v328
    %v337 = vadd.f32 %v262, %v329
    %v338 = vadd.f32 %v263, %v330
    %v339 = vadd.f32 %v264, %v331
    %v340 = vadd.f32 %v265, %v332
    %v341 = vadd.f32 %v266, %v333
    %v342 = vadd.f32 %v267, %v334
    %v343 = vadd.f32 %v268, %v335
    %344 = vset.pattern.permute.xlu0 1
    %345 = vperm.xlu0 %344, %v46
    %v346 = vpop.permute.xlu0 %345
    %348 = vset.pattern.permute.xlu0 1
    %349 = vperm.xlu0 %348, %v47
    %v350 = vpop.permute.xlu0 %349
    %v352 = vlaneseq
    %v353 = vshrl.u32 %v352, 7
    %v354 = vsub.s32 1, %v353
    %v355 = vrot.slane %v52, %v354
    %v356 = vlaneseq
    %v357 = vshrl.u32 %v356, 7
    %v358 = vsub.s32 1, %v357
    %v359 = vrot.slane %v53, %v358
    %v360 = vlaneseq
    %v361 = vshrl.u32 %v360, 7
    %v362 = vsub.s32 1, %v361
    %v363 = vrot.slane %v54, %v362
    %v364 = vlaneseq
    %v365 = vshrl.u32 %v364, 7
    %v366 = vsub.s32 1, %v365
    %v367 = vrot.slane %v55, %v366
    %v368 = vmul.f32 %v346, %v355
    %v369 = vmul.f32 %v346, %v359
    %v370 = vmul.f32 %v346, %v363
    %v371 = vmul.f32 %v346, %v367
    %v372 = vmul.f32 %v350, %v355
    %v373 = vmul.f32 %v350, %v359
    %v374 = vmul.f32 %v350, %v363
    %v375 = vmul.f32 %v350, %v367
    %376 = vrot.lane.b32.xlu0 %v243, 16
    %v377 = vpop.permute.xlu0 %376
    %378 = vrot.lane.b32.xlu0 %v247, 16
    %v379 = vpop.permute.xlu0 %378
    %380 = vrot.lane.b32.xlu0 %v244, 16
    %v381 = vpop.permute.xlu0 %380
    %382 = vrot.lane.b32.xlu0 %v248, 16
    %v383 = vpop.permute.xlu0 %382
    %384 = vrot.lane.b32.xlu0 %v245, 16
    %v385 = vpop.permute.xlu0 %384
    %386 = vrot.lane.b32.xlu0 %v249, 16
    %v387 = vpop.permute.xlu0 %386
    %388 = vrot.lane.b32.xlu0 %v246, 16
    %v389 = vpop.permute.xlu0 %388
    %390 = vrot.lane.b32.xlu0 %v250, 16
    %v391 = vpop.permute.xlu0 %390
    %vm392 = vcmp.lt.s32.totalorder %v318, 16
    %v393 = vsel %vm392, %v385, %v389
    %v394 = vsel %vm392, %v387, %v391
    %v395 = vsel %vm392, %v381, %v385
    %v396 = vsel %vm392, %v383, %v387
    %v397 = vsel %vm392, %v377, %v381
    %v398 = vsel %vm392, %v379, %v383
    %v399 = vsel %vm392, %v389, %v377
    %v400 = vsel %vm392, %v391, %v379
    %v401 = vmul.f32 %v399, %v368
    %v402 = vmul.f32 %v397, %v369
    %v403 = vmul.f32 %v395, %v370
    %v404 = vmul.f32 %v393, %v371
    %v405 = vmul.f32 %v400, %v372
    %v406 = vmul.f32 %v398, %v373
    %v407 = vmul.f32 %v396, %v374
    %v408 = vmul.f32 %v394, %v375
    %v409 = vadd.f32 %v336, %v401
    %v410 = vadd.f32 %v337, %v402
    %v411 = vadd.f32 %v338, %v403
    %v412 = vadd.f32 %v339, %v404
    %v413 = vadd.f32 %v340, %v405
    %v414 = vadd.f32 %v341, %v406
    %v415 = vadd.f32 %v342, %v407
    %v416 = vadd.f32 %v343, %v408
    %417 = vset.pattern.permute.xlu0 2
    %418 = vperm.xlu0 %417, %v46
    %v419 = vpop.permute.xlu0 %418
    %421 = vset.pattern.permute.xlu0 2
    %422 = vperm.xlu0 %421, %v47
    %v423 = vpop.permute.xlu0 %422
    %v425 = vlaneseq
    %v426 = vshrl.u32 %v425, 7
    %v427 = vsub.s32 2, %v426
    %v428 = vrot.slane %v52, %v427
    %v429 = vlaneseq
    %v430 = vshrl.u32 %v429, 7
    %v431 = vsub.s32 2, %v430
    %v432 = vrot.slane %v53, %v431
    %v433 = vlaneseq
    %v434 = vshrl.u32 %v433, 7
    %v435 = vsub.s32 2, %v434
    %v436 = vrot.slane %v54, %v435
    %v437 = vlaneseq
    %v438 = vshrl.u32 %v437, 7
    %v439 = vsub.s32 2, %v438
    %v440 = vrot.slane %v55, %v439
    %v441 = vmul.f32 %v419, %v428
    %v442 = vmul.f32 %v419, %v432
    %v443 = vmul.f32 %v419, %v436
    %v444 = vmul.f32 %v419, %v440
    %v445 = vmul.f32 %v423, %v428
    %v446 = vmul.f32 %v423, %v432
    %v447 = vmul.f32 %v423, %v436
    %v448 = vmul.f32 %v423, %v440
    %449 = vrot.lane.b32.xlu0 %v243, 15
    %v450 = vpop.permute.xlu0 %449
    %451 = vrot.lane.b32.xlu0 %v247, 15
    %v452 = vpop.permute.xlu0 %451
    %453 = vrot.lane.b32.xlu0 %v244, 15
    %v454 = vpop.permute.xlu0 %453
    %455 = vrot.lane.b32.xlu0 %v248, 15
    %v456 = vpop.permute.xlu0 %455
    %457 = vrot.lane.b32.xlu0 %v245, 15
    %v458 = vpop.permute.xlu0 %457
    %459 = vrot.lane.b32.xlu0 %v249, 15
    %v460 = vpop.permute.xlu0 %459
    %461 = vrot.lane.b32.xlu0 %v246, 15
    %v462 = vpop.permute.xlu0 %461
    %463 = vrot.lane.b32.xlu0 %v250, 15
    %v464 = vpop.permute.xlu0 %463
    %vm465 = vcmp.lt.s32.totalorder %v318, 15
    %v466 = vsel %vm465, %v458, %v462
    %v467 = vsel %vm465, %v460, %v464
    %v468 = vsel %vm465, %v454, %v458
    %v469 = vsel %vm465, %v456, %v460
    %v470 = vsel %vm465, %v450, %v454
    %v471 = vsel %vm465, %v452, %v456
    %v472 = vsel %vm465, %v462, %v450
    %v473 = vsel %vm465, %v464, %v452
    %v474 = vmul.f32 %v472, %v441
    %v475 = vmul.f32 %v470, %v442
    %v476 = vmul.f32 %v468, %v443
    %v477 = vmul.f32 %v466, %v444
    %v478 = vmul.f32 %v473, %v445
    %v479 = vmul.f32 %v471, %v446
    %v480 = vmul.f32 %v469, %v447
    %v481 = vmul.f32 %v467, %v448
    %v482 = vadd.f32 %v409, %v474
    %v483 = vadd.f32 %v410, %v475
    %v484 = vadd.f32 %v411, %v476
    %v485 = vadd.f32 %v412, %v477
    %v486 = vadd.f32 %v413, %v478
    %v487 = vadd.f32 %v414, %v479
    %v488 = vadd.f32 %v415, %v480
    %v489 = vadd.f32 %v416, %v481
    %490 = vset.pattern.permute.xlu0 3
    %491 = vperm.xlu0 %490, %v46
    %v492 = vpop.permute.xlu0 %491
    %494 = vset.pattern.permute.xlu0 3
    %495 = vperm.xlu0 %494, %v47
    %v496 = vpop.permute.xlu0 %495
    %v498 = vlaneseq
    %v499 = vshrl.u32 %v498, 7
    %v500 = vsub.s32 3, %v499
    %v501 = vrot.slane %v52, %v500
    %v502 = vlaneseq
    %v503 = vshrl.u32 %v502, 7
    %v504 = vsub.s32 3, %v503
    %v505 = vrot.slane %v53, %v504
    %v506 = vlaneseq
    %v507 = vshrl.u32 %v506, 7
    %v508 = vsub.s32 3, %v507
    %v509 = vrot.slane %v54, %v508
    %v510 = vlaneseq
    %v511 = vshrl.u32 %v510, 7
    %v512 = vsub.s32 3, %v511
    %v513 = vrot.slane %v55, %v512
    %v514 = vmul.f32 %v492, %v501
    %v515 = vmul.f32 %v492, %v505
    %v516 = vmul.f32 %v492, %v509
    %v517 = vmul.f32 %v492, %v513
    %v518 = vmul.f32 %v496, %v501
    %v519 = vmul.f32 %v496, %v505
    %v520 = vmul.f32 %v496, %v509
    %v521 = vmul.f32 %v496, %v513
    %522 = vrot.lane.b32.xlu0 %v243, 1
    %v523 = vpop.permute.xlu0 %522
    %524 = vrot.lane.b32.xlu0 %v247, 1
    %v525 = vpop.permute.xlu0 %524
    %526 = vrot.lane.b32.xlu0 %v244, 1
    %v527 = vpop.permute.xlu0 %526
    %528 = vrot.lane.b32.xlu0 %v248, 1
    %v529 = vpop.permute.xlu0 %528
    %530 = vrot.lane.b32.xlu0 %v245, 1
    %v531 = vpop.permute.xlu0 %530
    %532 = vrot.lane.b32.xlu0 %v249, 1
    %v533 = vpop.permute.xlu0 %532
    %534 = vrot.lane.b32.xlu0 %v246, 1
    %v535 = vpop.permute.xlu0 %534
    %536 = vrot.lane.b32.xlu0 %v250, 1
    %v537 = vpop.permute.xlu0 %536
    %vm538 = vcmp.lt.s32.totalorder %v318, 1
    %v539 = vsel %vm538, %v531, %v535
    %v540 = vsel %vm538, %v533, %v537
    %v541 = vsel %vm538, %v527, %v531
    %v542 = vsel %vm538, %v529, %v533
    %v543 = vsel %vm538, %v523, %v527
    %v544 = vsel %vm538, %v525, %v529
    %v545 = vsel %vm538, %v535, %v523
    %v546 = vsel %vm538, %v537, %v525
    %v547 = vmul.f32 %v545, %v514
    %v548 = vmul.f32 %v543, %v515
    %v549 = vmul.f32 %v541, %v516
    %v550 = vmul.f32 %v539, %v517
    %v551 = vmul.f32 %v546, %v518
    %v552 = vmul.f32 %v544, %v519
    %v553 = vmul.f32 %v542, %v520
    %v554 = vmul.f32 %v540, %v521
    %v555 = vadd.f32 %v482, %v547
    %v556 = vadd.f32 %v483, %v548
    %v557 = vadd.f32 %v484, %v549
    %v558 = vadd.f32 %v485, %v550
    %v559 = vadd.f32 %v486, %v551
    %v560 = vadd.f32 %v487, %v552
    %v561 = vadd.f32 %v488, %v553
    %v562 = vadd.f32 %v489, %v554
    %563 = vset.pattern.permute.xlu0 5
    %564 = vperm.xlu0 %563, %v46
    %v565 = vpop.permute.xlu0 %564
    %567 = vset.pattern.permute.xlu0 5
    %568 = vperm.xlu0 %567, %v47
    %v569 = vpop.permute.xlu0 %568
    %v571 = vlaneseq
    %v572 = vshrl.u32 %v571, 7
    %v573 = vsub.s32 5, %v572
    %v574 = vrot.slane %v52, %v573
    %v575 = vlaneseq
    %v576 = vshrl.u32 %v575, 7
    %v577 = vsub.s32 5, %v576
    %v578 = vrot.slane %v53, %v577
    %v579 = vlaneseq
    %v580 = vshrl.u32 %v579, 7
    %v581 = vsub.s32 5, %v580
    %v582 = vrot.slane %v54, %v581
    %v583 = vlaneseq
    %v584 = vshrl.u32 %v583, 7
    %v585 = vsub.s32 5, %v584
    %v586 = vrot.slane %v55, %v585
    %v587 = vmul.f32 %v565, %v574
    %v588 = vmul.f32 %v565, %v578
    %v589 = vmul.f32 %v565, %v582
    %v590 = vmul.f32 %v565, %v586
    %v591 = vmul.f32 %v569, %v574
    %v592 = vmul.f32 %v569, %v578
    %v593 = vmul.f32 %v569, %v582
    %v594 = vmul.f32 %v569, %v586
    %595 = vrot.lane.b32.xlu0 %v243, 127
    %v596 = vpop.permute.xlu0 %595
    %597 = vrot.lane.b32.xlu0 %v247, 127
    %v598 = vpop.permute.xlu0 %597
    %599 = vrot.lane.b32.xlu0 %v244, 127
    %v600 = vpop.permute.xlu0 %599
    %601 = vrot.lane.b32.xlu0 %v248, 127
    %v602 = vpop.permute.xlu0 %601
    %603 = vrot.lane.b32.xlu0 %v245, 127
    %v604 = vpop.permute.xlu0 %603
    %605 = vrot.lane.b32.xlu0 %v249, 127
    %v606 = vpop.permute.xlu0 %605
    %607 = vrot.lane.b32.xlu0 %v246, 127
    %v608 = vpop.permute.xlu0 %607
    %609 = vrot.lane.b32.xlu0 %v250, 127
    %v610 = vpop.permute.xlu0 %609
    %vm611 = vcmp.lt.s32.totalorder %v318, 127
    %v612 = vsel %vm611, %v604, %v608
    %v613 = vsel %vm611, %v606, %v610
    %v614 = vsel %vm611, %v600, %v604
    %v615 = vsel %vm611, %v602, %v606
    %v616 = vsel %vm611, %v596, %v600
    %v617 = vsel %vm611, %v598, %v602
    %v618 = vsel %vm611, %v608, %v596
    %v619 = vsel %vm611, %v610, %v598
    %v620 = vmul.f32 %v616, %v587
    %v621 = vmul.f32 %v614, %v588
    %v622 = vmul.f32 %v612, %v589
    %v623 = vmul.f32 %v618, %v590
    %v624 = vmul.f32 %v617, %v591
    %v625 = vmul.f32 %v615, %v592
    %v626 = vmul.f32 %v613, %v593
    %v627 = vmul.f32 %v619, %v594
    %v628 = vadd.f32 %v555, %v620
    %v629 = vadd.f32 %v556, %v621
    %v630 = vadd.f32 %v557, %v622
    %v631 = vadd.f32 %v558, %v623
    %v632 = vadd.f32 %v559, %v624
    %v633 = vadd.f32 %v560, %v625
    %v634 = vadd.f32 %v561, %v626
    %v635 = vadd.f32 %v562, %v627
    %636 = vset.pattern.permute.xlu0 6
    %637 = vperm.xlu0 %636, %v46
    %v638 = vpop.permute.xlu0 %637
    %640 = vset.pattern.permute.xlu0 6
    %641 = vperm.xlu0 %640, %v47
    %v642 = vpop.permute.xlu0 %641
    %v644 = vlaneseq
    %v645 = vshrl.u32 %v644, 7
    %v646 = vsub.s32 6, %v645
    %v647 = vrot.slane %v52, %v646
    %v648 = vlaneseq
    %v649 = vshrl.u32 %v648, 7
    %v650 = vsub.s32 6, %v649
    %v651 = vrot.slane %v53, %v650
    %v652 = vlaneseq
    %v653 = vshrl.u32 %v652, 7
    %v654 = vsub.s32 6, %v653
    %v655 = vrot.slane %v54, %v654
    %v656 = vlaneseq
    %v657 = vshrl.u32 %v656, 7
    %v658 = vsub.s32 6, %v657
    %v659 = vrot.slane %v55, %v658
    %v660 = vmul.f32 %v638, %v647
    %v661 = vmul.f32 %v638, %v651
    %v662 = vmul.f32 %v638, %v655
    %v663 = vmul.f32 %v638, %v659
    %v664 = vmul.f32 %v642, %v647
    %v665 = vmul.f32 %v642, %v651
    %v666 = vmul.f32 %v642, %v655
    %v667 = vmul.f32 %v642, %v659
    %668 = vrot.lane.b32.xlu0 %v243, 113
    %v669 = vpop.permute.xlu0 %668
    %670 = vrot.lane.b32.xlu0 %v247, 113
    %v671 = vpop.permute.xlu0 %670
    %672 = vrot.lane.b32.xlu0 %v244, 113
    %v673 = vpop.permute.xlu0 %672
    %674 = vrot.lane.b32.xlu0 %v248, 113
    %v675 = vpop.permute.xlu0 %674
    %676 = vrot.lane.b32.xlu0 %v245, 113
    %v677 = vpop.permute.xlu0 %676
    %678 = vrot.lane.b32.xlu0 %v249, 113
    %v679 = vpop.permute.xlu0 %678
    %680 = vrot.lane.b32.xlu0 %v246, 113
    %v681 = vpop.permute.xlu0 %680
    %682 = vrot.lane.b32.xlu0 %v250, 113
    %v683 = vpop.permute.xlu0 %682
    %vm684 = vcmp.lt.s32.totalorder %v318, 113
    %v685 = vsel %vm684, %v677, %v681
    %v686 = vsel %vm684, %v679, %v683
    %v687 = vsel %vm684, %v673, %v677
    %v688 = vsel %vm684, %v675, %v679
    %v689 = vsel %vm684, %v669, %v673
    %v690 = vsel %vm684, %v671, %v675
    %v691 = vsel %vm684, %v681, %v669
    %v692 = vsel %vm684, %v683, %v671
    %v693 = vmul.f32 %v689, %v660
    %v694 = vmul.f32 %v687, %v661
    %v695 = vmul.f32 %v685, %v662
    %v696 = vmul.f32 %v691, %v663
    %v697 = vmul.f32 %v690, %v664
    %v698 = vmul.f32 %v688, %v665
    %v699 = vmul.f32 %v686, %v666
    %v700 = vmul.f32 %v692, %v667
    %v701 = vadd.f32 %v628, %v693
    %v702 = vadd.f32 %v629, %v694
    %v703 = vadd.f32 %v630, %v695
    %v704 = vadd.f32 %v631, %v696
    %v705 = vadd.f32 %v632, %v697
    %v706 = vadd.f32 %v633, %v698
    %v707 = vadd.f32 %v634, %v699
    %v708 = vadd.f32 %v635, %v700
    %709 = vset.pattern.permute.xlu0 7
    %710 = vperm.xlu0 %709, %v46
    %v711 = vpop.permute.xlu0 %710
    %713 = vset.pattern.permute.xlu0 7
    %714 = vperm.xlu0 %713, %v47
    %v715 = vpop.permute.xlu0 %714
    %v717 = vlaneseq
    %v718 = vshrl.u32 %v717, 7
    %v719 = vsub.s32 7, %v718
    %v720 = vrot.slane %v52, %v719
    %v721 = vlaneseq
    %v722 = vshrl.u32 %v721, 7
    %v723 = vsub.s32 7, %v722
    %v724 = vrot.slane %v53, %v723
    %v725 = vlaneseq
    %v726 = vshrl.u32 %v725, 7
    %v727 = vsub.s32 7, %v726
    %v728 = vrot.slane %v54, %v727
    %v729 = vlaneseq
    %v730 = vshrl.u32 %v729, 7
    %v731 = vsub.s32 7, %v730
    %v732 = vrot.slane %v55, %v731
    %v733 = vmul.f32 %v711, %v720
    %v734 = vmul.f32 %v711, %v724
    %v735 = vmul.f32 %v711, %v728
    %v736 = vmul.f32 %v711, %v732
    %v737 = vmul.f32 %v715, %v720
    %v738 = vmul.f32 %v715, %v724
    %v739 = vmul.f32 %v715, %v728
    %v740 = vmul.f32 %v715, %v732
    %741 = vrot.lane.b32.xlu0 %v243, 112
    %v742 = vpop.permute.xlu0 %741
    %743 = vrot.lane.b32.xlu0 %v247, 112
    %v744 = vpop.permute.xlu0 %743
    %745 = vrot.lane.b32.xlu0 %v244, 112
    %v746 = vpop.permute.xlu0 %745
    %747 = vrot.lane.b32.xlu0 %v248, 112
    %v748 = vpop.permute.xlu0 %747
    %749 = vrot.lane.b32.xlu0 %v245, 112
    %v750 = vpop.permute.xlu0 %749
    %751 = vrot.lane.b32.xlu0 %v249, 112
    %v752 = vpop.permute.xlu0 %751
    %753 = vrot.lane.b32.xlu0 %v246, 112
    %v754 = vpop.permute.xlu0 %753
    %755 = vrot.lane.b32.xlu0 %v250, 112
    %v756 = vpop.permute.xlu0 %755
    %vm757 = vcmp.lt.s32.totalorder %v318, 112
    %v758 = vsel %vm757, %v750, %v754
    %v759 = vsel %vm757, %v752, %v756
    %v760 = vsel %vm757, %v746, %v750
    %v761 = vsel %vm757, %v748, %v752
    %v762 = vsel %vm757, %v742, %v746
    %v763 = vsel %vm757, %v744, %v748
    %v764 = vsel %vm757, %v754, %v742
    %v765 = vsel %vm757, %v756, %v744
    %v766 = vmul.f32 %v762, %v733
    %v767 = vmul.f32 %v760, %v734
    %v768 = vmul.f32 %v758, %v735
    %v769 = vmul.f32 %v764, %v736
    %v770 = vmul.f32 %v763, %v737
    %v771 = vmul.f32 %v761, %v738
    %v772 = vmul.f32 %v759, %v739
    %v773 = vmul.f32 %v765, %v740
    %v774 = vadd.f32 %v701, %v766
    %v775 = vadd.f32 %v702, %v767
    %v776 = vadd.f32 %v703, %v768
    %v777 = vadd.f32 %v704, %v769
    %v778 = vadd.f32 %v705, %v770
    %v779 = vadd.f32 %v706, %v771
    %v780 = vadd.f32 %v707, %v772
    %v781 = vadd.f32 %v708, %v773
    %782 = vset.pattern.permute.xlu0 8
    %783 = vperm.xlu0 %782, %v46
    %v784 = vpop.permute.xlu0 %783
    %786 = vset.pattern.permute.xlu0 8
    %787 = vperm.xlu0 %786, %v47
    %v788 = vpop.permute.xlu0 %787
    %v790 = vlaneseq
    %v791 = vshrl.u32 %v790, 7
    %v792 = vsub.s32 0, %v791
    %v793 = vrot.slane %v56, %v792
    %v794 = vlaneseq
    %v795 = vshrl.u32 %v794, 7
    %v796 = vsub.s32 0, %v795
    %v797 = vrot.slane %v57, %v796
    %v798 = vlaneseq
    %v799 = vshrl.u32 %v798, 7
    %v800 = vsub.s32 0, %v799
    %v801 = vrot.slane %v58, %v800
    %v802 = vlaneseq
    %v803 = vshrl.u32 %v802, 7
    %v804 = vsub.s32 0, %v803
    %v805 = vrot.slane %v59, %v804
    %v806 = vmul.f32 %v784, %v793
    %v807 = vmul.f32 %v784, %v797
    %v808 = vmul.f32 %v784, %v801
    %v809 = vmul.f32 %v784, %v805
    %v810 = vmul.f32 %v788, %v793
    %v811 = vmul.f32 %v788, %v797
    %v812 = vmul.f32 %v788, %v801
    %v813 = vmul.f32 %v788, %v805
    %814 = vrot.lane.b32.xlu0 %v243, 111
    %v815 = vpop.permute.xlu0 %814
    %816 = vrot.lane.b32.xlu0 %v247, 111
    %v817 = vpop.permute.xlu0 %816
    %818 = vrot.lane.b32.xlu0 %v244, 111
    %v819 = vpop.permute.xlu0 %818
    %820 = vrot.lane.b32.xlu0 %v248, 111
    %v821 = vpop.permute.xlu0 %820
    %822 = vrot.lane.b32.xlu0 %v245, 111
    %v823 = vpop.permute.xlu0 %822
    %824 = vrot.lane.b32.xlu0 %v249, 111
    %v825 = vpop.permute.xlu0 %824
    %826 = vrot.lane.b32.xlu0 %v246, 111
    %v827 = vpop.permute.xlu0 %826
    %828 = vrot.lane.b32.xlu0 %v250, 111
    %v829 = vpop.permute.xlu0 %828
    %vm830 = vcmp.lt.s32.totalorder %v318, 111
    %v831 = vsel %vm830, %v823, %v827
    %v832 = vsel %vm830, %v825, %v829
    %v833 = vsel %vm830, %v819, %v823
    %v834 = vsel %vm830, %v821, %v825
    %v835 = vsel %vm830, %v815, %v819
    %v836 = vsel %vm830, %v817, %v821
    %v837 = vsel %vm830, %v827, %v815
    %v838 = vsel %vm830, %v829, %v817
    %v839 = vmul.f32 %v835, %v806
    %v840 = vmul.f32 %v833, %v807
    %v841 = vmul.f32 %v831, %v808
    %v842 = vmul.f32 %v837, %v809
    %v843 = vmul.f32 %v836, %v810
    %v844 = vmul.f32 %v834, %v811
    %v845 = vmul.f32 %v832, %v812
    %v846 = vmul.f32 %v838, %v813
    %v847 = vadd.f32 %v774, %v839
    %v848 = vadd.f32 %v775, %v840
    %v849 = vadd.f32 %v776, %v841
    %v850 = vadd.f32 %v777, %v842
    %v851 = vadd.f32 %v778, %v843
    %v852 = vadd.f32 %v779, %v844
    %v853 = vadd.f32 %v780, %v845
    %v854 = vadd.f32 %v781, %v846
    %856 = vset.pattern.permute.xlu0 0
    %857 = vperm.xlu0 %856, %v48
    %v858 = vpop.permute.xlu0 %857
    %861 = vset.pattern.permute.xlu0 0
    %862 = vperm.xlu0 %861, %v49
    %v863 = vpop.permute.xlu0 %862
    %v865 = vadd.f32 %v847, %v858
    %v866 = vadd.f32 %v848, %v858
    %v867 = vadd.f32 %v849, %v858
    %v868 = vadd.f32 %v850, %v858
    %v869 = vadd.f32 %v851, %v863
    %v870 = vadd.f32 %v852, %v863
    %v871 = vadd.f32 %v853, %v863
    %v872 = vadd.f32 %v854, %v863
    %v873 = vmax.f32 %v865, 0.0
    %v874 = vmax.f32 %v866, 0.0
    %v875 = vmax.f32 %v867, 0.0
    %v876 = vmax.f32 %v868, 0.0
    %v877 = vmax.f32 %v869, 0.0
    %v878 = vmax.f32 %v870, 0.0
    %v879 = vmax.f32 %v871, 0.0
    %v880 = vmax.f32 %v872, 0.0
    %v881 = vmin.f32 %v873, 6.0
    %v882 = vmin.f32 %v874, 6.0
    %v883 = vmin.f32 %v875, 6.0
    %v884 = vmin.f32 %v876, 6.0
    %v885 = vmin.f32 %v877, 6.0
    %v886 = vmin.f32 %v878, 6.0
    %v887 = vmin.f32 %v879, 6.0
    %v888 = vmin.f32 %v880, 6.0
    %890 = vset.pattern.permute.xlu0 0
    %891 = vperm.xlu0 %890, %v51
    %v892 = vpop.permute.xlu0 %891
    %vm894 = vcmask 130048
    %v896 = vsel %vm894, %v50, 0
    %898 = vmatprep.subr.mxu0 %v882
    %899 = vmatpush1.msra.mxu0 %v881
    %900 = vmatprep.subr.mxu0 %v886
    %901 = vmatpush1.msra.mxu0 %v885
    %902 = vmatprep.subr.mxu0 0.0
    %903 = vmatpush1.msra.mxu0 0.0
    %904 = vmatprep.subr.mxu0 0.0
    %905 = vmatpush1.msra.mxu0 0.0
    %906 = vmatprep.subr.mxu0 0.0
    %907 = vmatpush1.msra.mxu0 0.0
    %908 = vmatprep.subr.mxu0 0.0
    %909 = vmatpush1.msra.mxu0 0.0
    %910 = vmatprep.subr.mxu0 0.0
    %911 = vmatpush1.msra.mxu0 0.0
    %912 = vmatprep.subr.mxu0 0.0
    %913 = vmatpush1.msra.mxu0 0.0
    %914 = vmatprep.subr.mxu0 0.0
    %915 = vmatpush1.msra.mxu0 0.0
    %916 = vmatprep.subr.mxu0 0.0
    %917 = vmatpush1.msra.mxu0 0.0
    %918 = vmatprep.subr.mxu0 0.0
    %919 = vmatpush1.msra.mxu0 0.0
    %920 = vmatprep.subr.mxu0 0.0
    %921 = vmatpush1.msra.mxu0 0.0
    %922 = vmatprep.subr.mxu0 0.0
    %923 = vmatpush1.msra.mxu0 0.0
    %924 = vmatprep.subr.mxu0 0.0
    %925 = vmatpush1.msra.mxu0 0.0
    %926 = vmatprep.subr.mxu0 0.0
    %927 = vmatpush1.msra.mxu0 0.0
    %928 = vmatprep.subr.mxu0 0.0
    %929 = vmatpush1.msra.mxu0 0.0
    %930 = vmatprep.subr.mxu0 0.0
    %931 = vmatpush1.msra.mxu0 0.0
    %932 = vmatprep.subr.mxu0 0.0
    %933 = vmatpush1.msra.mxu0 0.0
    %934 = vmatprep.subr.mxu0 0.0
    %935 = vmatpush1.msra.mxu0 0.0
    %936 = vmatprep.subr.mxu0 0.0
    %937 = vmatpush1.msra.mxu0 0.0
    %938 = vmatprep.subr.mxu0 0.0
    %939 = vmatpush1.msra.mxu0 0.0
    %940 = vmatprep.subr.mxu0 0.0
    %941 = vmatpush1.msra.mxu0 0.0
    %942 = vmatprep.subr.mxu0 0.0
    %943 = vmatpush1.msra.mxu0 0.0
    %944 = vmatprep.subr.mxu0 0.0
    %945 = vmatpush1.msra.mxu0 0.0
    %946 = vmatprep.subr.mxu0 0.0
    %947 = vmatpush1.msra.mxu0 0.0
    %948 = vmatprep.subr.mxu0 0.0
    %949 = vmatpush1.msra.mxu0 0.0
    %950 = vmatprep.subr.mxu0 0.0
    %951 = vmatpush1.msra.mxu0 0.0
    %952 = vmatprep.subr.mxu0 0.0
    %953 = vmatpush1.msra.mxu0 0.0
    %954 = vmatprep.subr.mxu0 0.0
    %955 = vmatpush1.msra.mxu0 0.0
    %956 = vmatprep.subr.mxu0 0.0
    %957 = vmatpush1.msra.mxu0 0.0
    %958 = vmatprep.subr.mxu0 0.0
    %959 = vmatpush1.msra.mxu0 0.0
    %960 = vmatprep.subr.mxu0 0.0
    %961 = vmatpush1.msra.mxu0 0.0
    %962 = vmatprep.mubr.f32.mxu0 0.0
    %963 = vmatmul.mubr.f32.gmra.mrb[0].mxu0 %v896
    %v964 = vpop.f32.mrb[0].mxu0
    %v965 = vadd.f32 %v892, %v964
    %v966 = vpop.f32.mrb[0].mxu0
    %v967 = vadd.f32 %v892, %v966
    %968 = vdwg.mxu0
    %969 = vmatprep.subr.mxu0 %v884
    %970 = vmatpush1.msra.mxu0 %v883
    %971 = vmatprep.subr.mxu0 %v888
    %972 = vmatpush1.msra.mxu0 %v887
    %973 = vmatprep.subr.mxu0 0.0
    %974 = vmatpush1.msra.mxu0 0.0
    %975 = vmatprep.subr.mxu0 0.0
    %976 = vmatpush1.msra.mxu0 0.0
    %977 = vmatprep.subr.mxu0 0.0
    %978 = vmatpush1.msra.mxu0 0.0
    %979 = vmatprep.subr.mxu0 0.0
    %980 = vmatpush1.msra.mxu0 0.0
    %981 = vmatprep.subr.mxu0 0.0
    %982 = vmatpush1.msra.mxu0 0.0
    %983 = vmatprep.subr.mxu0 0.0
    %984 = vmatpush1.msra.mxu0 0.0
    %985 = vmatprep.subr.mxu0 0.0
    %986 = vmatpush1.msra.mxu0 0.0
    %987 = vmatprep.subr.mxu0 0.0
    %988 = vmatpush1.msra.mxu0 0.0
    %989 = vmatprep.subr.mxu0 0.0
    %990 = vmatpush1.msra.mxu0 0.0
    %991 = vmatprep.subr.mxu0 0.0
    %992 = vmatpush1.msra.mxu0 0.0
    %993 = vmatprep.subr.mxu0 0.0
    %994 = vmatpush1.msra.mxu0 0.0
    %995 = vmatprep.subr.mxu0 0.0
    %996 = vmatpush1.msra.mxu0 0.0
    %997 = vmatprep.subr.mxu0 0.0
    %998 = vmatpush1.msra.mxu0 0.0
    %999 = vmatprep.subr.mxu0 0.0
    %1000 = vmatpush1.msra.mxu0 0.0
    %1001 = vmatprep.subr.mxu0 0.0
    %1002 = vmatpush1.msra.mxu0 0.0
    %1003 = vmatprep.subr.mxu0 0.0
    %1004 = vmatpush1.msra.mxu0 0.0
    %1005 = vmatprep.subr.mxu0 0.0
    %1006 = vmatpush1.msra.mxu0 0.0
    %1007 = vmatprep.subr.mxu0 0.0
    %1008 = vmatpush1.msra.mxu0 0.0
    %1009 = vmatprep.subr.mxu0 0.0
    %1010 = vmatpush1.msra.mxu0 0.0
    %1011 = vmatprep.subr.mxu0 0.0
    %1012 = vmatpush1.msra.mxu0 0.0
    %1013 = vmatprep.subr.mxu0 0.0
    %1014 = vmatpush1.msra.mxu0 0.0
    %1015 = vmatprep.subr.mxu0 0.0
    %1016 = vmatpush1.msra.mxu0 0.0
    %1017 = vmatprep.subr.mxu0 0.0
    %1018 = vmatpush1.msra.mxu0 0.0
    %1019 = vmatprep.subr.mxu0 0.0
    %1020 = vmatpush1.msra.mxu0 0.0
    %1021 = vmatprep.subr.mxu0 0.0
    %1022 = vmatpush1.msra.mxu0 0.0
    %1023 = vmatprep.subr.mxu0 0.0
    %1024 = vmatpush1.msra.mxu0 0.0
    %1025 = vmatprep.subr.mxu0 0.0
    %1026 = vmatpush1.msra.mxu0 0.0
    %1027 = vmatprep.subr.mxu0 0.0
    %1028 = vmatpush1.msra.mxu0 0.0
    %1029 = vmatprep.subr.mxu0 0.0
    %1030 = vmatpush1.msra.mxu0 0.0
    %1031 = vmatprep.subr.mxu0 0.0
    %1032 = vmatpush1.msra.mxu0 0.0
    %1033 = vmatprep.mubr.f32.mxu0 0.0
    %1034 = vmatmul.mubr.f32.gmra.mrb[0].mxu0 %v896
    %v1035 = vpop.f32.mrb[0].mxu0
    %v1036 = vadd.f32 %v892, %v1035
    %v1037 = vpop.f32.mrb[0].mxu0
    %v1038 = vadd.f32 %v892, %v1037
    %1039 = vdwg.mxu0
    %v1040 = vadd.f32 %v965, %v42
    %v1041 = vadd.f32 %v967, %v43
    %v1042 = vadd.f32 %v1036, %v44
    %v1043 = vadd.f32 %v1038, %v45
    %1044 = vst [vmem:[#allocation5] sm:$0xff] %v1040
    %1045 = vst [vmem:[#allocation5 + $0x8] sm:$0xff] %v1041
    %1046 = vst [vmem:[#allocation5 + $0x10] sm:$0xff] %v1042
    %1047 = vst [vmem:[#allocation5 + $0x18] sm:$0xff] %v1043
    // Predicated region
    $region38: #{tpu_custom_call.1} parent=1 // pred_check
      _
    $region39: #{tpu_custom_call.1} parent=1 // pred_check_branch
      %1049 = sbr.rel (0) target = $region41
    $region40: #{tpu_custom_call.1} parent=1 // pred_region
      %s1051 = ssub.s32 512, 512
      %1052 = vsyncadd [#allocation4], %s1051
      %s1054 = sshll.u32 [#allocation5], 4
      %s1055 = int_to_ptr.vmem [resolvable:$true] %s1054
      %1057 = dma.vmem_to_hbm [thread:$0]  %s1055, 512, %s8, [#allocation4]
    $region41: #{tpu_custom_call.1} parent=1 // pred_fallthru
      _
    // Predicated region
    $region42: #{tpu_custom_call.1} parent=1 // pred_check
      _
    $region43: #{tpu_custom_call.1} parent=1 // pred_check_branch
      %1059 = sbr.rel (0) target = $region45
    $region44: #{tpu_custom_call.1} parent=1 // pred_region
      %1060 = dma.done [#allocation4], 512
    $region45: #{tpu_custom_call.1} parent=1 // pred_fallthru
      _
    %1061 = vsyncpa [#allocation3], 1
    %1062 = vsyncpa [#allocation4], 1

</llo_original>
